<compile_context>
chip_gen: v6e
topology: v6e:2x2x1
jax: 0.10.0
libtpu: 0.0.40
codegen_flags: <defaults>
</compile_context>

<pallas_src>
import functools

import jax
import jax.numpy as jnp
from jax.experimental import pallas as pl
from jax.experimental.pallas import tpu as pltpu

LANE = 128


def _round_up(x, m):
    return ((x + m - 1) // m) * m


def _cdiv(a, b):
    return -(-a // b)


# -----------------------------------------------------------------------------
# Per-generation configuration
# -----------------------------------------------------------------------------
def _tpu_config():
    kind = ""
    try:
        kind = (jax.devices()[0].device_kind or "").lower()
    except Exception:
        pass
    is_v7 = ("v7" in kind) or ("tpu7" in kind)
    default_phys = (64 << 20) if is_v7 else (128 << 20)   # v7x: 64 MiB/TC, else 128 MiB
    try:
        phys = int(pltpu.get_tpu_info().vmem_capacity_bytes)
        if phys <= 0:
            phys = default_phys
    except Exception:
        phys = default_phys
    # Scoped-VMEM limit we request (defaults: 16 MiB v5e, 32 MiB v6e/v7x are too small
    # for 2-4 MiB streaming blocks + a resident fused slab).
    vmem_limit = int(min(phys * 3 // 4, 96 << 20))        # 96 MiB v5e/v6e, 48 MiB v7x
    return {
        "kind": kind,
        "is_v7": is_v7,
        "vmem_limit_bytes": vmem_limit,
        # Fused path holds: resident output slab + f32 finalize temp + 2 input tile
        # buffers + per-tile temps  =>  cap the f32 slab at ~vmem_limit/4.
        "fused_limit_bytes": int(min(vmem_limit // 4, 24 << 20)),   # ~24 MiB / ~12 MiB(v7x)
        # Streaming block target: ~2 MiB (4 MiB on v7x whose 3.2 TB/s HBM makes the
        # fixed ~0.35us/step overhead relatively larger).
        "block_bytes": (4 << 20) if is_v7 else (2 << 20),
        # v7x has 2 TensorCores per chip: split the reduce grid across them.
        "n_chunks": 2 if is_v7 else 1,
    }


_TPU_CONFIG = _tpu_config()


def _pick_tile_rows(num_rows, itemsize, block_bytes):
    """Rows per streaming block: ~block_bytes of input, multiple of 8, <= slab."""
    rows = max(8, (block_bytes // (LANE * max(int(itemsize), 1))) // 8 * 8)
    cap = _round_up(max(int(num_rows), 8), 8)
    return int(min(rows, cap))


def _fused_tile_rows(num_rows, target_rows):
    """Tile rows for the fused path: multiple of 8 AND an exact divisor of num_rows
    (so the in-kernel stash into the resident output slab never goes out of bounds).
    Returns None when no reasonable divisor exists (caller falls back to two-pass)."""
    if num_rows % 8 != 0:
        return None
    if num_rows <= target_rows:
        return int(num_rows)
    cand = (target_rows // 8) * 8
    while cand >= 512:
        if num_rows % cand == 0:
            return int(cand)
        cand -= 8
    return None


# -----------------------------------------------------------------------------
# Kernels
# -----------------------------------------------------------------------------
def _fused_kernel(wb_ref, x_ref, o_ref, stat_ref, acc_ref, *, tile_rows, n, eps):
    """Pipelined single-read/single-write path.

    Grid over row tiles; the output slab is VMEM-resident (constant block index).
    Per step: accumulate per-lane sum / sum-of-squares and stash the raw tile into
    the output slab.  At the last step compute the global scale/shift and normalize
    the slab in place (one HBM read + one HBM write total).
    """
    t = pl.program_id(0)

    @pl.when(t == 0)
    def _():
        acc_ref[...] = jnp.zeros_like(acc_ref)

    xf = x_ref[...].astype(jnp.float32)
    xr = xf.reshape(tile_rows // 8, 8, LANE)          # layout-preserving split
    acc_ref[0] = acc_ref[0] + jnp.sum(xr, axis=0)     # per-lane partials (VPU adds)
    acc_ref[1] = acc_ref[1] + jnp.sum(xr * xr, axis=0)

    # Stash the raw tile into the resident output slab (exact copy, same dtype).
    row0 = pl.multiple_of(t * tile_rows, tile_rows)
    o_ref[pl.ds(row0, tile_rows), :] = x_ref[...].astype(o_ref.dtype)

    @pl.when(t == pl.num_programs(0) - 1)
    def _():
        s = jnp.sum(acc_ref[0])
        ss = jnp.sum(acc_ref[1])
        nf = jnp.float32(n)
        mean = s / nf
        var = jnp.maximum(ss / nf - mean * mean, 0.0)  # cancellation guard
        inv_std = jax.lax.rsqrt(var + jnp.float32(eps))
        scale = inv_std * wb_ref[0]                    # weight
        shift = wb_ref[1] - mean * scale               # bias - mean*scale
        o_ref[...] = (o_ref[...].astype(jnp.float32) * scale + shift).astype(o_ref.dtype)
        stat_ref[0] = s                                # raw sums for running stats
        stat_ref[1] = ss


def _reduce_kernel(x_ref, acc_ref, *, tile_rows, tiles_per_chunk, valid_rows,
                   mask_rows):
    """Accumulate per-lane partial sum / sum-of-squares into a (2, 8, LANE) block.

    The accumulator block index depends only on the leading ("parallel") chunk axis,
    so it stays VMEM-resident across the inner ("arbitrary") tile axis.  Over-covered
    or partial tiles are masked to zero BEFORE squaring (there is no runtime OOB
    check on TPU, and the input index_map is clamped so the DMA never walks off the
    slab; the mask uses the UNclamped logical tile origin).
    """
    p = pl.program_id(0)
    t = pl.program_id(1)

    @pl.when(t == 0)
    def _():
        acc_ref[...] = jnp.zeros_like(acc_ref)

    xf = x_ref[...].astype(jnp.float32)
    if mask_rows:  # static: only emitted when the grid over-covers the slab
        row0 = (p * tiles_per_chunk + t) * tile_rows   # logical (unclamped) origin
        rid = row0 + jax.lax.broadcasted_iota(jnp.int32, xf.shape, 0)
        xf = jnp.where(rid < valid_rows, xf, 0.0)      # mask BEFORE squaring

    xr = xf.reshape(tile_rows // 8, 8, LANE)            # layout-preserving split
    acc_ref[0] = acc_ref[0] + jnp.sum(xr, axis=0)
    acc_ref[1] = acc_ref[1] + jnp.sum(xr * xr, axis=0)


def _norm_kernel(params_ref, x_ref, o_ref):
    """Elementwise x * scale + shift (scalars from SMEM; mean folded into shift)."""
    scale = params_ref[0]
    shift = params_ref[1]
    o_ref[...] = (x_ref[...].astype(jnp.float32) * scale + shift).astype(o_ref.dtype)


# -----------------------------------------------------------------------------
# Wrapper
# -----------------------------------------------------------------------------
def tensor_norm_forward(
    x,
    weight,
    bias,
    running_mean,
    running_var,
    eps=1e-4,
    momentum=0.1,
    training=True,
    *,
    fused_limit_bytes=None,
    fused_tile_rows=None,
    reduce_tile_rows=None,
    norm_tile_rows=None,
    n_chunks=None,
    config=None,
):
    """Returns (out, new_running_mean, new_running_var)."""
    cfg = _TPU_CONFIG if config is None else config
    orig_shape = x.shape
    orig_dtype = x.dtype
    itemsize = x.dtype.itemsize
    n = int(x.size)
    nf = jnp.float32(n)

    vmem_limit = cfg["vmem_limit_bytes"]
    block_bytes = cfg["block_bytes"]
    fused_cap = cfg["fused_limit_bytes"] if fused_limit_bytes is None else fused_limit_bytes
    nchunks = cfg["n_chunks"] if n_chunks is None else n_chunks

    # ---- lane-dense (rows, 128) view; pad only when numel is not 128-aligned ----
    rows = _cdiv(n, LANE)
    padded = rows * LANE != n
    if padded:
        # Rare lane-ragged fallback: zero-pad the (<128-element) tail (zeros do not
        # perturb sum / sum-of-squares); the output is sliced back below.
        flat = jnp.pad(x.reshape(-1), (0, rows * LANE - n))
        x2d = flat.reshape(rows, LANE)
    else:
        x2d = x.reshape(rows, LANE)      # free contiguous reshape, original dtype
    R = rows

    w32 = weight[0].astype(jnp.float32)
    b32 = bias[0].astype(jnp.float32)

    def stats_from_sums(total, total_sq):
        mean = total / nf
        biased = jnp.maximum(total_sq / nf - mean * mean, 0.0)
        unbiased = biased * (nf / jnp.maximum(nf - 1.0, 1.0))   # n==1 guard (0, not NaN)
        return mean, biased, unbiased

    def finish(out2d):
        if padded:
            return out2d.reshape(-1)[:n].reshape(orig_shape)
        return out2d.reshape(orig_shape)

    # ------------- fused single-read / single-write path (training) -------------
    slab_f32_bytes = R * LANE * 4            # in-kernel f32 working size of the slab
    if training and slab_f32_bytes <= fused_cap:
        if fused_tile_rows is not None:
            rt_f = fused_tile_rows if (fused_tile_rows % 8 == 0
                                       and R % fused_tile_rows == 0) else None
        else:
            rt_f = _fused_tile_rows(R, _pick_tile_rows(R, itemsize, block_bytes))
        if rt_f is not None:
            n_steps = R // rt_f
            wb = jnp.stack([w32, b32])
            out2d, stats = pl.pallas_call(
                functools.partial(_fused_kernel, tile_rows=rt_f, n=n, eps=float(eps)),
                out_shape=(
                    jax.ShapeDtypeStruct((R, LANE), orig_dtype),
                    jax.ShapeDtypeStruct((2,), jnp.float32),
                ),
                grid=(n_steps,),
                in_specs=[
                    pl.BlockSpec(memory_space=pltpu.SMEM),
                    pl.BlockSpec((rt_f, LANE), lambda t: (t, 0)),
                ],
                out_specs=(
                    pl.BlockSpec((R, LANE), lambda t: (0, 0)),   # VMEM-resident slab
                    pl.BlockSpec(memory_space=pltpu.SMEM),
                ),
                scratch_shapes=[pltpu.VMEM((2, 8, LANE), jnp.float32)],
                compiler_params=pltpu.CompilerParams(
                    dimension_semantics=("arbitrary",),
                    vmem_limit_bytes=vmem_limit),
            )(wb, x2d)
            mean, _, unbiased_var = stats_from_sums(stats[0], stats[1])
            new_rm = (1.0 - momentum) * running_mean + momentum * mean
            new_rv = (1.0 - momentum) * running_var + momentum * unbiased_var
            return finish(out2d), new_rm, new_rv

    # --------------- two-pass path: tiled reduce, then tiled normalize -----------
    if training:
        rt = _pick_tile_rows(R, itemsize, block_bytes) if reduce_tile_rows is None \
            else reduce_tile_rows
        assert rt % 8 == 0, "reduce tile rows must be a multiple of 8"
        num_tiles = _cdiv(R, rt)
        nck = max(1, min(nchunks, num_tiles))
        tpc = _cdiv(num_tiles, nck)
        mask_rows = (nck * tpc * rt) != R      # partial last tile and/or duplicates
        last_block = num_tiles - 1

        def x_index_map(p, t):
            # Clamp so the DMA never walks past the slab; over-covered (duplicate)
            # tiles are fully masked to zero in the kernel (mask uses the unclamped
            # logical origin).
            return (jnp.minimum(p * tpc + t, last_block), 0)

        partials = pl.pallas_call(
            functools.partial(_reduce_kernel, tile_rows=rt, tiles_per_chunk=tpc,
                              valid_rows=R, mask_rows=mask_rows),
            out_shape=jax.ShapeDtypeStruct((nck, 2, 8, LANE), jnp.float32),
            grid=(nck, tpc),
            in_specs=[pl.BlockSpec((rt, LANE), x_index_map)],
            out_specs=pl.BlockSpec((None, 2, 8, LANE), lambda p, t: (p, 0, 0, 0)),
            compiler_params=pltpu.CompilerParams(
                dimension_semantics=("parallel", "arbitrary"),
                vmem_limit_bytes=vmem_limit),
        )(x2d)

        sums = jnp.sum(partials, axis=(0, 2, 3))          # tiny (nck,2,8,128) glue
        mean, biased_var, unbiased_var = stats_from_sums(sums[0], sums[1])
        inv_std = jax.lax.rsqrt(biased_var + jnp.float32(eps))
        new_rm = (1.0 - momentum) * running_mean + momentum * mean
        new_rv = (1.0 - momentum) * running_var + momentum * unbiased_var
    else:
        mean = running_mean[0].astype(jnp.float32)
        inv_std = jax.lax.rsqrt(running_var[0].astype(jnp.float32) + jnp.float32(eps))
        new_rm = running_mean
        new_rv = running_var

    scale = inv_std * w32
    shift = b32 - mean * scale
    params = jnp.stack([scale, shift])

    nt = _pick_tile_rows(R, itemsize, block_bytes) if norm_tile_rows is None \
        else norm_tile_rows
    assert nt % 8 == 0, "norm tile rows must be a multiple of 8"
    out2d = pl.pallas_call(
        _norm_kernel,
        out_shape=jax.ShapeDtypeStruct((R, LANE), orig_dtype),
        grid=(_cdiv(R, nt),),
        in_specs=[
            pl.BlockSpec(memory_space=pltpu.SMEM),
            pl.BlockSpec((nt, LANE), lambda i: (i, 0)),
        ],
        out_specs=pl.BlockSpec((nt, LANE), lambda i: (i, 0)),
        compiler_params=pltpu.CompilerParams(
            dimension_semantics=("parallel",),
            vmem_limit_bytes=vmem_limit),
    )(params, x2d)

    return finish(out2d), new_rm, new_rv


# -----------------------------------------------------------------------------
# Self-test
# -----------------------------------------------------------------------------
if __name__ == "__main__":
    key = jax.random.PRNGKey(0)
    k1, k2, k3, k4 = jax.random.split(key, 4)

    eps, momentum = 1e-4, 0.1
    # Parameter init matching reset_running_stats():
    weight = jnp.ones((1,), jnp.float32)
    bias = jnp.zeros((1,), jnp.float32)
    running_mean = jnp.zeros((1,), jnp.float32)
    running_var = jnp.ones((1,), jnp.float32)

    def reference(x):
        mean = jnp.mean(x)
        biased = jnp.mean((x - mean) ** 2)
        unbiased = jnp.sum((x - mean) ** 2) / (x.size - 1)
        out = (x - mean) / jnp.sqrt(biased + eps) * weight[0] + bias[0]
        rm = (1.0 - momentum) * running_mean + momentum * mean
        rv = (1.0 - momentum) * running_var + momentum * unbiased
        return out, rm, rv

    def check(tag, got, ref, atol=5e-5):
        o, rm, rv = got
        ro, rrm, rrv = ref
        assert jnp.allclose(o, ro, atol=atol, rtol=1e-5), f"{tag}: output mismatch"
        assert jnp.allclose(rm, rrm, atol=1e-5), f"{tag}: running_mean mismatch"
        assert jnp.allclose(rv, rrv, atol=1e-5), f"{tag}: running_var mismatch"

    # 1) Small NCHW tensor -> fused single-pass path (single resident tile).
    x1 = jax.random.normal(k1, (2, 4, 16, 16), dtype=jnp.float32)
    r1 = tensor_norm_forward(x1, weight, bias, running_mean, running_var,
                             eps=eps, momentum=momentum, training=True)
    jax.block_until_ready(r1)
    check("fused-1tile", r1, reference(x1))

    # 2) 128-aligned tensor forced through the PIPELINED fused path (4 row tiles:
    #    exercises the multi-step stash + in-place finalize).
    x2 = jax.random.normal(k2, (2, 4, 64, 128), dtype=jnp.float32)
    r2 = tensor_norm_forward(x2, weight, bias, running_mean, running_var,
                             eps=eps, momentum=momentum, training=True,
                             fused_tile_rows=128)
    jax.block_until_ready(r2)
    check("fused-pipelined", r2, reference(x2))

    # 3) Lane-ragged size forced through the two-pass path with small tiles and a
    #    2-chunk parallel reduce: exercises the pad fallback, odd tile count with
    #    a clamped duplicate tile, partial-block masking, and multi-tile accumulation.
    x3 = jax.random.normal(k3, (2, 3, 50, 60), dtype=jnp.float32)
    r3 = tensor_norm_forward(x3, weight, bias, running_mean, running_var,
                             eps=eps, momentum=momentum, training=True,
                             fused_limit_bytes=0, reduce_tile_rows=48,
                             norm_tile_rows=48, n_chunks=2)
    jax.block_until_ready(r3)
    check("two-pass-ragged", r3, reference(x3))

    # 4) 128-aligned but non-tile-aligned rows, two-pass, no pad anywhere:
    #    partial last block on both reduce and norm passes + clamped duplicate.
    x4 = jax.random.normal(k4, (3, 7, 8, 128), dtype=jnp.float32)
    r4 = tensor_norm_forward(x4, weight, bias, running_mean, running_var,
                             eps=eps, momentum=momentum, training=True,
                             fused_limit_bytes=0, reduce_tile_rows=64,
                             norm_tile_rows=64, n_chunks=2)
    jax.block_until_ready(r4)
    check("two-pass-aligned", r4, reference(x4))

    # 5) Eval mode (uses running stats).
    out5, _, _ = tensor_norm_forward(x1, weight, bias, running_mean, running_var,
                                     eps=eps, momentum=momentum, training=False)
    jax.block_until_ready(out5)
    ref5 = (x1 - running_mean[0]) / jnp.sqrt(running_var[0] + eps) * weight[0] + bias[0]
    assert jnp.allclose(out5, ref5, atol=5e-5, rtol=1e-5), "eval: output mismatch"

    print("KERNEL_OK")
</pallas_src>

<mosaic_0001>
module attributes {stable_mosaic.version = 11 : i64} {
  func.func @_fused_kernel(%arg0: i32, %arg1: memref<2xf32, #tpu.memory_space<smem>>, %arg2: memref<16x128xf32, #tpu.memory_space<vmem>>, %arg3: memref<16x128xf32, #tpu.memory_space<vmem>>, %arg4: memref<2xf32, #tpu.memory_space<smem>>, %arg5: memref<2x8x128xf32, #tpu.memory_space<vmem>>) attributes {dimension_semantics = [#tpu.dimension_semantics<arbitrary>], iteration_bounds = array<i64: 1>, scalar_prefetch = 0 : i64, scratch_operands = 1 : i64, tpu.core_type = #tpu.core_type<tc>, window_params = [{transform_indices = @transform_0, window_bounds = array<i64: 2>}, {transform_indices = @transform_1, window_bounds = array<i64: 16, 128>}, {pipeline_mode = #tpu.pipeline_mode<synchronous>, transform_indices = @transform_2, window_bounds = array<i64: 16, 128>}, {transform_indices = @transform_3, window_bounds = array<i64: 2>}]} {
    %c0_i32 = arith.constant 0 : i32
    %0 = arith.cmpi eq, %arg0, %c0_i32 : i32
    %1 = arith.extui %0 : i1 to i32
    %c0_i32_0 = arith.constant 0 : i32
    %2 = arith.cmpi ne, %1, %c0_i32_0 : i32
    scf.if %2 {
      %cst_19 = arith.constant 0.000000e+00 : f32
      %28 = vector.broadcast %cst_19 : f32 to vector<2x8x128xf32>
      %c0_20 = arith.constant 0 : index
      %c0_21 = arith.constant 0 : index
      %c0_22 = arith.constant 0 : index
      %29 = vector.load %arg5[%c0_20, %c0_21, %c0_22] : memref<2x8x128xf32, #tpu.memory_space<vmem>>, vector<2x8x128xf32>
      tpu.vector_store %arg5[%c0_20, %c0_21, %c0_22], %28 {strides = array<i32>} : memref<2x8x128xf32, #tpu.memory_space<vmem>>, vector<2x8x128xf32>,
    } else {
    }
    %c0 = arith.constant 0 : index
    %c0_1 = arith.constant 0 : index
    %3 = vector.load %arg2[%c0, %c0_1] : memref<16x128xf32, #tpu.memory_space<vmem>>, vector<16x128xf32>
    %4 = vector.shape_cast %3 : vector<16x128xf32> to vector<2x8x128xf32>
    %c0_2 = arith.constant 0 : index
    %c0_3 = arith.constant 0 : index
    %c0_4 = arith.constant 0 : index
    %5 = vector.load %arg5[%c0_2, %c0_3, %c0_4] : memref<2x8x128xf32, #tpu.memory_space<vmem>>, vector<1x8x128xf32>
    %6 = vector.shape_cast %5 : vector<1x8x128xf32> to vector<8x128xf32>
    %cst = arith.constant dense<0.000000e+00> : vector<8x128xf32>
    %7 = vector.multi_reduction <add>, %4, %cst [0] : vector<2x8x128xf32> to vector<8x128xf32>
    %8 = arith.addf %6, %7 : vector<8x128xf32>
    %c0_5 = arith.constant 0 : index
    %c0_6 = arith.constant 0 : index
    %c0_7 = arith.constant 0 : index
    %9 = vector.load %arg5[%c0_5, %c0_6, %c0_7] : memref<2x8x128xf32, #tpu.memory_space<vmem>>, vector<1x8x128xf32>
    %10 = vector.shape_cast %9 : vector<1x8x128xf32> to vector<8x128xf32>
    %11 = vector.shape_cast %8 : vector<8x128xf32> to vector<1x8x128xf32>
    tpu.vector_store %arg5[%c0_5, %c0_6, %c0_7], %11 {strides = array<i32>} : memref<2x8x128xf32, #tpu.memory_space<vmem>>, vector<1x8x128xf32>,
    %c1 = arith.constant 1 : index
    %c0_8 = arith.constant 0 : index
    %c0_9 = arith.constant 0 : index
    %12 = vector.load %arg5[%c1, %c0_8, %c0_9] : memref<2x8x128xf32, #tpu.memory_space<vmem>>, vector<1x8x128xf32>
    %13 = vector.shape_cast %12 : vector<1x8x128xf32> to vector<8x128xf32>
    %14 = arith.mulf %4, %4 : vector<2x8x128xf32>
    %cst_10 = arith.constant dense<0.000000e+00> : vector<8x128xf32>
    %15 = vector.multi_reduction <add>, %14, %cst_10 [0] : vector<2x8x128xf32> to vector<8x128xf32>
    %16 = arith.addf %13, %15 : vector<8x128xf32>
    %c1_11 = arith.constant 1 : index
    %c0_12 = arith.constant 0 : index
    %c0_13 = arith.constant 0 : index
    %17 = vector.load %arg5[%c1_11, %c0_12, %c0_13] : memref<2x8x128xf32, #tpu.memory_space<vmem>>, vector<1x8x128xf32>
    %18 = vector.shape_cast %17 : vector<1x8x128xf32> to vector<8x128xf32>
    %19 = vector.shape_cast %16 : vector<8x128xf32> to vector<1x8x128xf32>
    tpu.vector_store %arg5[%c1_11, %c0_12, %c0_13], %19 {strides = array<i32>} : memref<2x8x128xf32, #tpu.memory_space<vmem>>, vector<1x8x128xf32>,
    %c16_i32 = arith.constant 16 : i32
    %20 = arith.muli %arg0, %c16_i32 : i32
    %21 = tpu.assume_multiple %20, 16 : i32
    %c0_14 = arith.constant 0 : index
    %c0_15 = arith.constant 0 : index
    %22 = vector.load %arg2[%c0_14, %c0_15] : memref<16x128xf32, #tpu.memory_space<vmem>>, vector<16x128xf32>
    %23 = arith.index_cast %21 : i32 to index
    %c0_16 = arith.constant 0 : index
    %24 = vector.load %arg3[%23, %c0_16] : memref<16x128xf32, #tpu.memory_space<vmem>>, vector<16x128xf32>
    tpu.vector_store %arg3[%23, %c0_16], %22 {strides = array<i32>} : memref<16x128xf32, #tpu.memory_space<vmem>>, vector<16x128xf32>,
    %c0_i32_17 = arith.constant 0 : i32
    %25 = arith.cmpi eq, %arg0, %c0_i32_17 : i32
    %26 = arith.extui %25 : i1 to i32
    %c0_i32_18 = arith.constant 0 : i32
    %27 = arith.cmpi ne, %26, %c0_i32_18 : i32
    scf.if %27 {
      %c0_19 = arith.constant 0 : index
      %c0_20 = arith.constant 0 : index
      %c0_21 = arith.constant 0 : index
      %28 = vector.load %arg5[%c0_19, %c0_20, %c0_21] : memref<2x8x128xf32, #tpu.memory_space<vmem>>, vector<1x8x128xf32>
      %29 = vector.shape_cast %28 : vector<1x8x128xf32> to vector<8x128xf32>
      %30 = vector.shape_cast %29 : vector<8x128xf32> to vector<1x8x128xf32>
      %cst_22 = arith.constant dense<0.000000e+00> : vector<1xf32>
      %31 = vector.multi_reduction <add>, %30, %cst_22 [1, 2] : vector<1x8x128xf32> to vector<1xf32>
      %32 = vector.shape_cast %31 : vector<1xf32> to vector<1x1x1xf32>
      %33 = vector.extract %32[0, 0, 0] : f32 from vector<1x1x1xf32>
      %c1_23 = arith.constant 1 : index
      %c0_24 = arith.constant 0 : index
      %c0_25 = arith.constant 0 : index
      %34 = vector.load %arg5[%c1_23, %c0_24, %c0_25] : memref<2x8x128xf32, #tpu.memory_space<vmem>>, vector<1x8x128xf32>
      %35 = vector.shape_cast %34 : vector<1x8x128xf32> to vector<8x128xf32>
      %36 = vector.shape_cast %35 : vector<8x128xf32> to vector<1x8x128xf32>
      %cst_26 = arith.constant dense<0.000000e+00> : vector<1xf32>
      %37 = vector.multi_reduction <add>, %36, %cst_26 [1, 2] : vector<1x8x128xf32> to vector<1xf32>
      %38 = vector.shape_cast %37 : vector<1xf32> to vector<1x1x1xf32>
      %39 = vector.extract %38[0, 0, 0] : f32 from vector<1x1x1xf32>
      %cst_27 = arith.constant 2.048000e+03 : f32
      %40 = arith.divf %33, %cst_27 : f32
      %cst_28 = arith.constant 2.048000e+03 : f32
      %41 = arith.divf %39, %cst_28 : f32
      %42 = arith.mulf %40, %40 : f32
      %43 = arith.subf %41, %42 : f32
      %cst_29 = arith.constant 0.000000e+00 : f32
      %44 = arith.maximumf %43, %cst_29 : f32
      %cst_30 = arith.constant 9.99999974E-5 : f32
      %45 = arith.addf %44, %cst_30 : f32
      %46 = math.rsqrt %45 : f32
      %c0_31 = arith.constant 0 : index
      %47 = memref.load %arg1[%c0_31] : memref<2xf32, #tpu.memory_space<smem>>
      %48 = arith.mulf %46, %47 : f32
      %c1_32 = arith.constant 1 : index
      %49 = memref.load %arg1[%c1_32] : memref<2xf32, #tpu.memory_space<smem>>
      %50 = arith.mulf %40, %48 : f32
      %51 = arith.subf %49, %50 : f32
      %c0_33 = arith.constant 0 : index
      %c0_34 = arith.constant 0 : index
      %52 = vector.load %arg3[%c0_33, %c0_34] : memref<16x128xf32, #tpu.memory_space<vmem>>, vector<16x128xf32>
      %53 = vector.broadcast %48 : f32 to vector<16x128xf32>
      %54 = arith.mulf %52, %53 : vector<16x128xf32>
      %55 = vector.broadcast %51 : f32 to vector<16x128xf32>
      %56 = arith.addf %54, %55 : vector<16x128xf32>
      %c0_35 = arith.constant 0 : index
      %c0_36 = arith.constant 0 : index
      %57 = vector.load %arg3[%c0_35, %c0_36] : memref<16x128xf32, #tpu.memory_space<vmem>>, vector<16x128xf32>
      tpu.vector_store %arg3[%c0_35, %c0_36], %56 {strides = array<i32>} : memref<16x128xf32, #tpu.memory_space<vmem>>, vector<16x128xf32>,
      %c0_37 = arith.constant 0 : index
      %58 = memref.load %arg4[%c0_37] : memref<2xf32, #tpu.memory_space<smem>>
      memref.store %33, %arg4[%c0_37] : memref<2xf32, #tpu.memory_space<smem>>
      %c1_38 = arith.constant 1 : index
      %59 = memref.load %arg4[%c1_38] : memref<2xf32, #tpu.memory_space<smem>>
      memref.store %39, %arg4[%c1_38] : memref<2xf32, #tpu.memory_space<smem>>
    } else {
    }
    return
  }
  func.func @transform_0(%arg0: i32) -> i32 {
    %c0_i32 = arith.constant 0 : i32
    %c0_i32_0 = arith.constant 0 : i32
    return %c0_i32 : i32
  }
  func.func @transform_1(%arg0: i32) -> (i32, i32) {
    %c0_i32 = arith.constant 0 : i32
    %c0_i32_0 = arith.constant 0 : i32
    return %arg0, %c0_i32 : i32, i32
  }
  func.func @transform_2(%arg0: i32) -> (i32, i32) {
    %c0_i32 = arith.constant 0 : i32
    %c0_i32_0 = arith.constant 0 : i32
    %c0_i32_1 = arith.constant 0 : i32
    return %c0_i32, %c0_i32_0 : i32, i32
  }
  func.func @transform_3(%arg0: i32) -> i32 {
    %c0_i32 = arith.constant 0 : i32
    %c0_i32_0 = arith.constant 0 : i32
    return %c0_i32 : i32
  }
}

</mosaic_0001>

<llo_original>
// kernel: tpu_custom_call.1
$region0: #{tpu_custom_call.1}
  #allocation0 [shape = 'u32[]', space=smem, size = 0x4, offset = 0x4, fixed_abs, tag = 'smem constant byte address 0x4 - core index']
  #allocation1 [shape = 'u32[144,128]{1,0:T(1,128)}', space=vmem, size = 0x12000, scoped, tag = 'internal scratch']
  #allocation2 [shape = 'f32[2,8,128]{2,1,0:T(8,128)}', space=vmem, size = 0x2000, scoped, tag = 'scratch operand']
  %s0 = inlined_call_operand.hbm [shape: f32[2], index: 0, kind: input, shape index: {}]
  %s1 = inlined_call_operand.hbm [shape: f32[16,128], index: 1, kind: input, shape index: {}]
  %s2 = inlined_call_operand.hbm [shape: f32[16,128], index: 2, kind: output, shape index: {0}]
  %s3 = inlined_call_operand.hbm [shape: f32[2], index: 3, kind: output, shape index: {1}]
  %4 = xla_tuple %s2, %s3
  %s5 = sld [smem:[#allocation0]]
  $region42: #{tpu_custom_call.1} parent=0
    _
  %s7 = ssub.s32 1, %s5
  %s8 = scalar_select 0, %s7, %s5
  $region1: #{tpu_custom_call.1} parent=0
    #allocation3 [shape = 'u8[512]{0}', space=smem, size = 0x200, scoped, tag = 'input window, operand 0, single buffered']
    #allocation4 [shape = 's32[1]{0}', space=sflag, size = 0x4, scoped, tag = 'scoped memory for tpu_custom_call.1']
    #allocation5 [shape = 's32[1]{0}', space=sflag, size = 0x4, scoped, tag = 'scoped memory for tpu_custom_call.1']
    #allocation6 [shape = 's32[1]{0}', space=sflag, size = 0x4, scoped, tag = 'scoped memory for tpu_custom_call.1']
    #allocation7 [shape = 's32[1]{0}', space=sflag, size = 0x4, scoped, tag = 'scoped memory for tpu_custom_call.1']
    #allocation8 [shape = 'u8[8192]{0}', space=vmem, size = 0x2000, scoped, tag = 'input window, operand 1, single buffered']
    #allocation9 [shape = 'u8[8192]{0}', space=vmem, size = 0x2000, scoped, tag = 'output window, operand 0, single buffered']
    #allocation10 [shape = 'u8[512]{0}', space=smem, size = 0x200, scoped, tag = 'output window, operand 1, single buffered']
    %9 = vsyncpa [#allocation6], 0
    %10 = vsyncpa [#allocation4], 0
    %11 = vsyncpa [#allocation5], 0
    %12 = vsyncpa [#allocation7], 0
    // Predicated region
    $region2: #{tpu_custom_call.1} parent=1 // pred_check
      _
    $region3: #{tpu_custom_call.1} parent=1 // pred_check_branch
      %14 = sbr.rel (0) target = $region5
    $region4: #{tpu_custom_call.1} parent=1 // pred_region
      %s16 = ssub.s32 16, 16
      %17 = vsyncadd [#allocation6], %s16
      %20 = dma.hbm_to_smem %s0, 16, [#allocation3], [#allocation6]
    $region5: #{tpu_custom_call.1} parent=1 // pred_fallthru
      _
    // Predicated region
    $region6: #{tpu_custom_call.1} parent=1 // pred_check
      _
    $region7: #{tpu_custom_call.1} parent=1 // pred_check_branch
      %22 = sbr.rel (0) target = $region9
    $region8: #{tpu_custom_call.1} parent=1 // pred_region
      %s24 = ssub.s32 256, 256
      %25 = vsyncadd [#allocation4], %s24
      %s26 = sshll.u32 [#allocation8], 4
      %s27 = int_to_ptr.vmem [resolvable:$true] %s26
      %32 = dma.hbm_to_vmem [thread:$0]  %s1, 256, %s27, [#allocation4], 128, 128, 8
    $region9: #{tpu_custom_call.1} parent=1 // pred_fallthru
      _
    // Predicated region
    $region10: #{tpu_custom_call.1} parent=1 // pred_check
      _
    $region11: #{tpu_custom_call.1} parent=1 // pred_check_branch
      %34 = sbr.rel (0) target = $region13
    $region12: #{tpu_custom_call.1} parent=1 // pred_region
      %35 = dma.done [#allocation6], 16
    $region13: #{tpu_custom_call.1} parent=1 // pred_fallthru
      _
    // Predicated region
    $region14: #{tpu_custom_call.1} parent=1 // pred_check
      _
    $region15: #{tpu_custom_call.1} parent=1 // pred_check_branch
      %37 = sbr.rel (0) target = $region17
    $region16: #{tpu_custom_call.1} parent=1 // pred_region
      %38 = dma.done [#allocation4], 256
    $region17: #{tpu_custom_call.1} parent=1 // pred_fallthru
      _
    %39 = sfence
    %p40 = scmp.eq.s32.totalorder 0, 0
    // Predicated region
    $region18: #{tpu_custom_call.1} parent=1 // pred_check
      %p41 = pneg %p40
    $region19: #{tpu_custom_call.1} parent=1 // pred_check_branch
      %43 = sbr.rel (%p41) target = $region21
    $region20: #{tpu_custom_call.1} parent=1 // pred_region
      %44 = vst [vmem:[#allocation2] sm:$0xff] 0.0
      %45 = vst [vmem:[#allocation2 + $0x8] sm:$0xff] 0.0
    $region21: #{tpu_custom_call.1} parent=1 // pred_fallthru
      _
    %v46 = vld [vmem:[#allocation8] sm:$0xff]
    %v47 = vld [vmem:[#allocation8 + $0x8] sm:$0xff]
    %v48 = vld [vmem:[#allocation2] sm:$0xff]
    %v49 = vadd.f32 %v46, %v47
    %v50 = vadd.f32 %v48, %v49
    %51 = vst [vmem:[#allocation2] sm:$0xff] %v50
    %s52 = scalar_lea.vmem [#allocation2], 8
    %v53 = vld [vmem:[%s52] sm:$0xff]
    %v54 = vmul.f32 %v46, %v46
    %v55 = vmul.f32 %v47, %v47
    %v56 = vadd.f32 %v54, %v55
    %v57 = vadd.f32 %v53, %v56
    %58 = vst [vmem:[%s52] sm:$0xff] %v57
    %s59 = smul.u32 0, 16
    %v60 = vld [vmem:[#allocation8] sm:$0xff]
    %v61 = vld [vmem:[#allocation8 + $0x8] sm:$0xff]
    %s62 = scalar_lea.vmem [#allocation9], %s59
    %63 = vst [vmem:[%s62] sm:$0xff] %v60
    %64 = vst [vmem:[%s62 + $0x8] sm:$0xff] %v61
    // Predicated region
    $region22: #{tpu_custom_call.1} parent=1 // pred_check
      %p65 = pneg %p40
    $region23: #{tpu_custom_call.1} parent=1 // pred_check_branch
      %67 = sbr.rel (%p65) target = $region25
    $region24: #{tpu_custom_call.1} parent=1 // pred_region
      %v68 = vld [vmem:[#allocation2] sm:$0xff]
      %69 = vadd.xlane.f32.xlu0 %v68
      %v70 = vpop.xlane.xlu0 %69
      %v71 = vrot.slane %v70, 4
      %v72 = vadd.f32 %v70, %v71
      %v73 = vrot.slane %v72, 2
      %v74 = vadd.f32 %v72, %v73
      %v75 = vrot.slane %v74, 1
      %v76 = vadd.f32 %v74, %v75
      %s77 = vtos %v76
      %v78 = vld [vmem:[%s52] sm:$0xff]
      %79 = vadd.xlane.f32.xlu0 %v78
      %v80 = vpop.xlane.xlu0 %79
      %v81 = vrot.slane %v80, 4
      %v82 = vadd.f32 %v80, %v81
      %v83 = vrot.slane %v82, 2
      %v84 = vadd.f32 %v82, %v83
      %v85 = vrot.slane %v84, 1
      %v86 = vadd.f32 %v84, %v85
      %s87 = vtos %v86
      %v88 = vrcp.pop 2048.0
      %s89 = vtos %v88
      %s90 = smul.f32 %s77, %s89
      %v91 = vrcp.pop 2048.0
      %s92 = vtos %v91
      %s93 = smul.f32 %s87, %s92
      %s94 = smul.f32 %s90, %s90
      %s95 = ssub.f32 %s93, %s94
      %s96 = smax.f32 %s95, 0.0
      %s97 = sadd.f32 %s96, 0.0001
      %v98 = vstv %s97
      %v99 = vrsqrt.pop %v98
      %s100 = vtos %v99
      %s101 = sld [smem:[#allocation3]]
      %s102 = smul.f32 %s100, %s101
      %s103 = sld [smem:[#allocation3 + $0x1]]
      %s104 = smul.f32 %s90, %s102
      %s105 = ssub.f32 %s103, %s104
      %v106 = vld [vmem:[#allocation9] sm:$0xff]
      %v107 = vld [vmem:[#allocation9 + $0x8] sm:$0xff]
      %v108 = vstv %s102
      %v109 = vmul.f32 %v106, %v108
      %v110 = vmul.f32 %v107, %v108
      %v111 = vstv %s105
      %v112 = vadd.f32 %v109, %v111
      %v113 = vadd.f32 %v110, %v111
      %114 = vst [vmem:[#allocation9] sm:$0xff] %v112
      %115 = vst [vmem:[#allocation9 + $0x8] sm:$0xff] %v113
      %s116 = scalar_lea.smem [#allocation10], 0
      %117 = sst [smem:[%s116]] %s77
      %s118 = scalar_lea.smem [#allocation10], 1
      %119 = sst [smem:[%s118]] %s87
    $region25: #{tpu_custom_call.1} parent=1 // pred_fallthru
      _
    // Predicated region
    $region26: #{tpu_custom_call.1} parent=1 // pred_check
      _
    $region27: #{tpu_custom_call.1} parent=1 // pred_check_branch
      %121 = sbr.rel (0) target = $region29
    $region28: #{tpu_custom_call.1} parent=1 // pred_region
      %s123 = ssub.s32 256, 256
      %124 = vsyncadd [#allocation5], %s123
      %s125 = sshll.u32 [#allocation9], 4
      %s126 = int_to_ptr.vmem [resolvable:$true] %s125
      %131 = dma.vmem_to_hbm [thread:$0]  %s126, 256, %s2, [#allocation5], 128, 128, 8
    $region29: #{tpu_custom_call.1} parent=1 // pred_fallthru
      _
    // Predicated region
    $region30: #{tpu_custom_call.1} parent=1 // pred_check
      _
    $region31: #{tpu_custom_call.1} parent=1 // pred_check_branch
      %133 = sbr.rel (0) target = $region33
    $region32: #{tpu_custom_call.1} parent=1 // pred_region
      %s135 = ssub.s32 16, 16
      %136 = vsyncadd [#allocation7], %s135
      %139 = dma.smem_to_hbm [#allocation10], 16, %s3, [#allocation7]
    $region33: #{tpu_custom_call.1} parent=1 // pred_fallthru
      _
    // Predicated region
    $region34: #{tpu_custom_call.1} parent=1 // pred_check
      _
    $region35: #{tpu_custom_call.1} parent=1 // pred_check_branch
      %141 = sbr.rel (0) target = $region37
    $region36: #{tpu_custom_call.1} parent=1 // pred_region
      %142 = dma.done [#allocation5], 256
    $region37: #{tpu_custom_call.1} parent=1 // pred_fallthru
      _
    // Predicated region
    $region38: #{tpu_custom_call.1} parent=1 // pred_check
      _
    $region39: #{tpu_custom_call.1} parent=1 // pred_check_branch
      %144 = sbr.rel (0) target = $region41
    $region40: #{tpu_custom_call.1} parent=1 // pred_region
      %145 = dma.done [#allocation7], 16
    $region41: #{tpu_custom_call.1} parent=1 // pred_fallthru
      _
    %146 = sfence
    %147 = vsyncpa [#allocation4], 1
    %148 = vsyncpa [#allocation5], 1
    %149 = vsyncpa [#allocation6], 1
    %150 = vsyncpa [#allocation7], 1

</llo_original>
